<compile_context>
chip_gen: v7x
topology: tpu7x:2x2x1
jax: 0.10.0
libtpu: 0.0.40
codegen_flags: <defaults>
</compile_context>

<pallas_src>
import functools
import math

import jax
import jax.numpy as jnp
from jax.experimental import pallas as pl
from jax.experimental.pallas import tpu as pltpu

_SUBLANE = 8
_MAX_TM = 2048          # ~1 MiB x-tile + ~1 MiB out-tile (double-buffered) << VMEM
_SMALL_M = 512          # single-block path below this


def _round_up(x, m):
    return ((x + m - 1) // m) * m


# ----------------------------------------------------------------------------
# Fused kernel: z = x @ w + b ; out = log_softmax(z, axis=-1)
# ----------------------------------------------------------------------------
def _fc_logsoftmax_kernel(x_ref, w_ref, b_ref, o_ref):
    # x: (TM, 84), w: (84, 10), b: (1, 10) -> o: (TM, 10)   (all f32)
    z = jnp.dot(x_ref[...], w_ref[...], preferred_element_type=jnp.float32)
    z = z + b_ref[...]
    m = jnp.max(z, axis=-1, keepdims=True)
    s = z - m
    lse = jnp.log(jnp.sum(jnp.exp(s), axis=-1, keepdims=True))
    o_ref[...] = (s - lse).astype(o_ref.dtype)


# ----------------------------------------------------------------------------
# One-time parameter prep (hoisted out of the forward path)
# ----------------------------------------------------------------------------
def prepare_fcoutput_params(params):
    """Transpose the PyTorch (out, in) weight to MXU-friendly (in, out) once."""
    w_t = jnp.asarray(params["w"], jnp.float32).T          # (84, 10)
    b = jnp.asarray(params["b"], jnp.float32).reshape(1, -1)  # (1, 10)
    return {"w_t": w_t, "b": b}


def _pick_tm(M):
    """Row-tile size: single block for small batches, 512-2048 rows otherwise,
    keeping >= 2 grid steps so v7x megacore sharding stays active."""
    if M <= _SMALL_M:
        return M
    half = _round_up(-(-M // 2), _SUBLANE)   # cdiv(M, 2) rounded to sublane
    return min(_MAX_TM, half)


# ----------------------------------------------------------------------------
# Forward: one pallas_call, no host pads / slices on the hot path
# ----------------------------------------------------------------------------
def fcoutput_forward(prepped, x):
    """x: (M, 84) float32 -> (M, 10) log-probabilities."""
    M, K = x.shape
    Kw, N = prepped["w_t"].shape
    assert K == Kw, (K, Kw)

    TM = _pick_tm(M)
    grid = (pl.cdiv(M, TM),)

    return pl.pallas_call(
        _fc_logsoftmax_kernel,
        out_shape=jax.ShapeDtypeStruct((M, N), jnp.float32),
        grid_spec=pltpu.PrefetchScalarGridSpec(
            num_scalar_prefetch=0,
            grid=grid,
            in_specs=[
                pl.BlockSpec((TM, K), lambda i: (i, 0)),   # full trailing dim (84)
                pl.BlockSpec((Kw, N), lambda i: (0, 0)),   # whole weight, resident
                pl.BlockSpec((1, N), lambda i: (0, 0)),    # whole bias, resident
            ],
            out_specs=pl.BlockSpec((TM, N), lambda i: (i, 0)),  # narrow (TM, 10) writeback
        ),
        compiler_params=pltpu.CompilerParams(
            dimension_semantics=("parallel",),
        ),
    )(x, prepped["w_t"], prepped["b"])


# ----------------------------------------------------------------------------
# Parameter init (PyTorch nn.Linear default: U(-1/sqrt(fan_in), 1/sqrt(fan_in)))
# ----------------------------------------------------------------------------
def init_fcoutput_params(key):
    bound = 1.0 / math.sqrt(84.0)
    kw, kb = jax.random.split(key)
    return {
        "w": jax.random.uniform(kw, (10, 84), jnp.float32, -bound, bound),
        "b": jax.random.uniform(kb, (10,), jnp.float32, -bound, bound),
    }


# ----------------------------------------------------------------------------
# Pure-JAX reference for correctness
# ----------------------------------------------------------------------------
def _reference_forward(params, x):
    z = x @ params["w"].T + params["b"]
    return jax.nn.log_softmax(z, axis=-1)


if __name__ == "__main__":
    key = jax.random.PRNGKey(0)
    pkey, xkey = jax.random.split(key)

    params = init_fcoutput_params(pkey)
    prepped = prepare_fcoutput_params(params)   # one-time weight prep
    x = jax.random.normal(xkey, (2, 84), dtype=jnp.float32)   # batch=2, feat=84

    out = jax.block_until_ready(fcoutput_forward(prepped, x))
    assert out.shape == (2, 10), out.shape

    ref = jax.block_until_ready(_reference_forward(params, x))
    assert jnp.allclose(out, ref, atol=1e-4, rtol=1e-4), (
        "Pallas output mismatch vs reference"
    )

    print("KERNEL_OK")
</pallas_src>

<mosaic_0001>
module attributes {stable_mosaic.version = 11 : i64} {
  func.func @_fc_logsoftmax_kernel(%arg0: i32, %arg1: memref<2x84xf32, #tpu.memory_space<vmem>>, %arg2: memref<84x10xf32, #tpu.memory_space<vmem>>, %arg3: memref<1x10xf32, #tpu.memory_space<vmem>>, %arg4: memref<2x10xf32, #tpu.memory_space<vmem>>) attributes {dimension_semantics = [#tpu.dimension_semantics<parallel>], iteration_bounds = array<i64: 1>, scalar_prefetch = 0 : i64, scratch_operands = 0 : i64, tpu.core_type = #tpu.core_type<tc>, window_params = [{transform_indices = @transform_0, window_bounds = array<i64: 2, 84>}, {pipeline_mode = #tpu.pipeline_mode<synchronous>, transform_indices = @transform_1, window_bounds = array<i64: 84, 10>}, {pipeline_mode = #tpu.pipeline_mode<synchronous>, transform_indices = @transform_2, window_bounds = array<i64: 1, 10>}, {transform_indices = @transform_3, window_bounds = array<i64: 2, 10>}]} {
    %c0 = arith.constant 0 : index
    %c0_0 = arith.constant 0 : index
    %0 = vector.load %arg1[%c0, %c0_0] : memref<2x84xf32, #tpu.memory_space<vmem>>, vector<2x84xf32>
    %c0_1 = arith.constant 0 : index
    %c0_2 = arith.constant 0 : index
    %1 = vector.load %arg2[%c0_1, %c0_2] : memref<84x10xf32, #tpu.memory_space<vmem>>, vector<84x10xf32>
    %cst = arith.constant dense<0.000000e+00> : vector<2x10xf32>
    %2 = tpu.matmul %0, %1, %cst {dimension_numbers = #tpu.dot_dimension_numbers<[1], [0], [0], [1], [0, 0, 1, 1], [], []>} : vector<2x84xf32>, vector<84x10xf32>, vector<2x10xf32> -> vector<2x10xf32>
    %c0_3 = arith.constant 0 : index
    %c0_4 = arith.constant 0 : index
    %3 = vector.load %arg3[%c0_3, %c0_4] : memref<1x10xf32, #tpu.memory_space<vmem>>, vector<1x10xf32>
    %4 = vector.broadcast %3 : vector<1x10xf32> to vector<2x10xf32>
    %5 = arith.addf %2, %4 : vector<2x10xf32>
    %cst_5 = arith.constant dense<0xFF800000> : vector<2xf32>
    %6 = vector.multi_reduction <maximumf>, %5, %cst_5 [1] : vector<2x10xf32> to vector<2xf32>
    %7 = vector.shape_cast %6 : vector<2xf32> to vector<2x1xf32>
    %8 = vector.broadcast %7 : vector<2x1xf32> to vector<2x10xf32>
    %9 = arith.subf %5, %8 : vector<2x10xf32>
    %10 = math.exp %9 : vector<2x10xf32>
    %cst_6 = arith.constant dense<0.000000e+00> : vector<2xf32>
    %11 = vector.multi_reduction <add>, %10, %cst_6 [1] : vector<2x10xf32> to vector<2xf32>
    %12 = vector.shape_cast %11 : vector<2xf32> to vector<2x1xf32>
    %13 = math.log %12 : vector<2x1xf32>
    %14 = vector.broadcast %13 : vector<2x1xf32> to vector<2x10xf32>
    %15 = arith.subf %9, %14 : vector<2x10xf32>
    %c0_7 = arith.constant 0 : index
    %c0_8 = arith.constant 0 : index
    %16 = vector.load %arg4[%c0_7, %c0_8] : memref<2x10xf32, #tpu.memory_space<vmem>>, vector<2x10xf32>
    tpu.vector_store %arg4[%c0_7, %c0_8], %15 {strides = array<i32>} : memref<2x10xf32, #tpu.memory_space<vmem>>, vector<2x10xf32>,
    return
  }
  func.func @transform_0(%arg0: i32) -> (i32, i32) {
    %c0_i32 = arith.constant 0 : i32
    %c0_i32_0 = arith.constant 0 : i32
    return %arg0, %c0_i32 : i32, i32
  }
  func.func @transform_1(%arg0: i32) -> (i32, i32) {
    %c0_i32 = arith.constant 0 : i32
    %c0_i32_0 = arith.constant 0 : i32
    %c0_i32_1 = arith.constant 0 : i32
    return %c0_i32, %c0_i32_0 : i32, i32
  }
  func.func @transform_2(%arg0: i32) -> (i32, i32) {
    %c0_i32 = arith.constant 0 : i32
    %c0_i32_0 = arith.constant 0 : i32
    %c0_i32_1 = arith.constant 0 : i32
    return %c0_i32, %c0_i32_0 : i32, i32
  }
  func.func @transform_3(%arg0: i32) -> (i32, i32) {
    %c0_i32 = arith.constant 0 : i32
    %c0_i32_0 = arith.constant 0 : i32
    return %arg0, %c0_i32 : i32, i32
  }
}

</mosaic_0001>

<llo_original>
// kernel: tpu_custom_call.1
$region0: #{tpu_custom_call.1}
  #allocation0 [shape = 'u32[]', space=smem, size = 0x4, offset = 0x4, fixed_abs, tag = 'smem constant byte address 0x4 - core index']
  #allocation1 [shape = 'u32[144,128]{1,0:T(1,128)}', space=vmem, size = 0x12000, scoped, tag = 'internal scratch']
  %s0 = inlined_call_operand.vmem [shape: f32[2,84], index: 0, kind: input, shape index: {}]
  %s1 = inlined_call_operand.vmem [shape: f32[84,10], index: 1, kind: input, shape index: {}]
  %s2 = inlined_call_operand.vmem [shape: f32[1,10], index: 2, kind: input, shape index: {}]
  %s3 = inlined_call_operand.hbm [shape: f32[2,10], index: 3, kind: output, shape index: {}]
  %s4 = sld [smem:[#allocation0]]
  $region22: #{tpu_custom_call.1} parent=0
    _
  %s6 = ssub.s32 1, %s4
  %s7 = scalar_select 0, %s6, %s4
  $region1: #{tpu_custom_call.1} parent=0
    #allocation2 [shape = 'u8[1024]{0}', space=vmem, size = 0x400, scoped, tag = 'output window, operand 0, single buffered']
    #allocation3 [shape = 's32[1]{0}', space=sflag, size = 0x4, scoped, tag = 'scoped memory for tpu_custom_call.1']
    %8 = vsyncpa [#allocation3], 0
    // Predicated region
    $region2: #{tpu_custom_call.1} parent=1 // pred_check
      _
    $region3: #{tpu_custom_call.1} parent=1 // pred_check_branch
      %10 = sbr.rel (0) target = $region5
    $region4: #{tpu_custom_call.1} parent=1 // pred_region
      _
    $region5: #{tpu_custom_call.1} parent=1 // pred_fallthru
      _
    // Predicated region
    $region6: #{tpu_custom_call.1} parent=1 // pred_check
      _
    $region7: #{tpu_custom_call.1} parent=1 // pred_check_branch
      %12 = sbr.rel (0) target = $region9
    $region8: #{tpu_custom_call.1} parent=1 // pred_region
      _
    $region9: #{tpu_custom_call.1} parent=1 // pred_fallthru
      _
    // Predicated region
    $region10: #{tpu_custom_call.1} parent=1 // pred_check
      _
    $region11: #{tpu_custom_call.1} parent=1 // pred_check_branch
      %14 = sbr.rel (0) target = $region13
    $region12: #{tpu_custom_call.1} parent=1 // pred_region
      _
    $region13: #{tpu_custom_call.1} parent=1 // pred_fallthru
      _
    %v15 = vld [vmem:[%s0] sm:$0x3]
    %v16 = vld [vmem:[%s1] sm:$0xff]
    %v17 = vld [vmem:[%s1 + $0x8] sm:$0xff]
    %v18 = vld [vmem:[%s1 + $0x10] sm:$0xff]
    %v19 = vld [vmem:[%s1 + $0x18] sm:$0xff]
    %v20 = vld [vmem:[%s1 + $0x20] sm:$0xff]
    %v21 = vld [vmem:[%s1 + $0x28] sm:$0xff]
    %v22 = vld [vmem:[%s1 + $0x30] sm:$0xff]
    %v23 = vld [vmem:[%s1 + $0x38] sm:$0xff]
    %v24 = vld [vmem:[%s1 + $0x40] sm:$0xff]
    %v25 = vld [vmem:[%s1 + $0x48] sm:$0xff]
    %v26 = vld [vmem:[%s1 + $0x50] sm:$0xf]
    %v27 = vld [vmem:[%s2] sm:$0x1]
    %v29 = vlaneseq
    %v30 = vshrl.u32 %v29, 7
    %v31 = vsub.s32 0, %v30
    %v32 = vrot.slane %v27, %v31
    %vm34 = vcmask 687104
    %v36 = vsel %vm34, %v15, 0
    %vm38 = vcmask 1043456
    %v40 = vsel %vm38, %v26, 0
    %42 = vmatprep.subr.mxu0 0.0
    %43 = vmatpush1.msra.mxu0 %v16
    %44 = vmatprep.subr.mxu0 0.0
    %45 = vmatpush1.msra.mxu0 %v17
    %46 = vmatprep.subr.mxu0 0.0
    %47 = vmatpush1.msra.mxu0 %v18
    %48 = vmatprep.subr.mxu0 0.0
    %49 = vmatpush1.msra.mxu0 %v19
    %50 = vmatprep.subr.mxu0 0.0
    %51 = vmatpush1.msra.mxu0 %v20
    %52 = vmatprep.subr.mxu0 0.0
    %53 = vmatpush1.msra.mxu0 %v21
    %54 = vmatprep.subr.mxu0 0.0
    %55 = vmatpush1.msra.mxu0 %v22
    %56 = vmatprep.subr.mxu0 0.0
    %57 = vmatpush1.msra.mxu0 %v23
    %58 = vmatprep.subr.mxu0 0.0
    %59 = vmatpush1.msra.mxu0 %v24
    %60 = vmatprep.subr.mxu0 0.0
    %61 = vmatpush1.msra.mxu0 %v25
    %62 = vmatprep.subr.mxu0 0.0
    %63 = vmatpush1.msra.mxu0 %v40
    %64 = vmatprep.subr.mxu0 0.0
    %65 = vmatpush1.msra.mxu0 0.0
    %66 = vmatprep.subr.mxu0 0.0
    %67 = vmatpush1.msra.mxu0 0.0
    %68 = vmatprep.subr.mxu0 0.0
    %69 = vmatpush1.msra.mxu0 0.0
    %70 = vmatprep.subr.mxu0 0.0
    %71 = vmatpush1.msra.mxu0 0.0
    %72 = vmatprep.subr.mxu0 0.0
    %73 = vmatpush1.msra.mxu0 0.0
    %74 = vmatprep.subr.mxu0 0.0
    %75 = vmatpush1.msra.mxu0 0.0
    %76 = vmatprep.subr.mxu0 0.0
    %77 = vmatpush1.msra.mxu0 0.0
    %78 = vmatprep.subr.mxu0 0.0
    %79 = vmatpush1.msra.mxu0 0.0
    %80 = vmatprep.subr.mxu0 0.0
    %81 = vmatpush1.msra.mxu0 0.0
    %82 = vmatprep.subr.mxu0 0.0
    %83 = vmatpush1.msra.mxu0 0.0
    %84 = vmatprep.subr.mxu0 0.0
    %85 = vmatpush1.msra.mxu0 0.0
    %86 = vmatprep.subr.mxu0 0.0
    %87 = vmatpush1.msra.mxu0 0.0
    %88 = vmatprep.subr.mxu0 0.0
    %89 = vmatpush1.msra.mxu0 0.0
    %90 = vmatprep.subr.mxu0 0.0
    %91 = vmatpush1.msra.mxu0 0.0
    %92 = vmatprep.subr.mxu0 0.0
    %93 = vmatpush1.msra.mxu0 0.0
    %94 = vmatprep.subr.mxu0 0.0
    %95 = vmatpush1.msra.mxu0 0.0
    %96 = vmatprep.subr.mxu0 0.0
    %97 = vmatpush1.msra.mxu0 0.0
    %98 = vmatprep.subr.mxu0 0.0
    %99 = vmatpush1.msra.mxu0 0.0
    %100 = vmatprep.subr.mxu0 0.0
    %101 = vmatpush1.msra.mxu0 0.0
    %102 = vmatprep.subr.mxu0 0.0
    %103 = vmatpush1.msra.mxu0 0.0
    %104 = vmatprep.subr.mxu0 0.0
    %105 = vmatpush1.msra.mxu0 0.0
    %106 = vmatprep.mubr.f32.mxu0 0.0
    %107 = vmatmul.mubr.f32.gmra.mrb[0].mxu0 %v36
    %v108 = vpop.f32.mrb[0].mxu0
    %v109 = vadd.f32 %v32, %v108
    %v110 = vpop.f32.mrb[0].mxu0
    %111 = vdwg.mxu0
    %vm112 = vcmask 74752
    %v113 = vsel %vm112, %v109, -inf
    %114 = vmax.xlane.f32.xlu0 %v113
    %v115 = vpop.xlane.xlu0 %114
    %v116 = vsub.f32 %v109, %v115
    %v117 = vmul.f32 %v116, 1.442695
    %v118 = vpow.pop %v117
    %v119 = vsel %vm112, %v118, 0.0
    %120 = vadd.xlane.f32.xlu0 %v119
    %v121 = vpop.xlane.xlu0 %120
    %v122 = vlog2.pop %v121
    %v123 = vmul.f32 %v122, 0.6931472
    %v124 = vsub.f32 %v116, %v123
    %125 = vst.msk [vmem:[#allocation2] sm:$0x3] %vm112, %v124
    // Predicated region
    $region14: #{tpu_custom_call.1} parent=1 // pred_check
      _
    $region15: #{tpu_custom_call.1} parent=1 // pred_check_branch
      %127 = sbr.rel (0) target = $region17
    $region16: #{tpu_custom_call.1} parent=1 // pred_region
      %s129 = ssub.s32 32, 32
      %130 = vsyncadd [#allocation3], %s129
      %s132 = sshll.u32 [#allocation2], 4
      %s133 = int_to_ptr.vmem [resolvable:$true] %s132
      %135 = dma.vmem_to_hbm [thread:$0]  %s133, 32, %s3, [#allocation3]
    $region17: #{tpu_custom_call.1} parent=1 // pred_fallthru
      _
    // Predicated region
    $region18: #{tpu_custom_call.1} parent=1 // pred_check
      _
    $region19: #{tpu_custom_call.1} parent=1 // pred_check_branch
      %137 = sbr.rel (0) target = $region21
    $region20: #{tpu_custom_call.1} parent=1 // pred_region
      %138 = dma.done [#allocation3], 32
    $region21: #{tpu_custom_call.1} parent=1 // pred_fallthru
      _
    %139 = vsyncpa [#allocation3], 1

</llo_original>
